<compile_context>
chip_gen: v7x
topology: tpu7x:2x2x1
jax: 0.10.0
libtpu: 0.0.40
codegen_flags: <defaults>
</compile_context>

<pallas_src>
import functools

import jax
import jax.numpy as jnp
from jax import lax
from jax.experimental import pallas as pl
from jax.experimental.pallas import tpu as pltpu

_LANE = 128
_ROW_CHUNK = 256            # rows per in-kernel streaming chunk (multiple of 8)


def _vmem_budget():
    """(tile_budget_bytes, vmem_limit_bytes), generation-aware."""
    cap = None
    try:
        cap = getattr(pltpu.get_tpu_info(), "vmem_capacity_bytes", None)
    except Exception:  # pragma: no cover - info query unavailable
        cap = None
    if cap is None or cap <= 0:
        cap = 64 * 1024 * 1024          # conservative default (v7x per-TC)
    if cap >= 96 * 1024 * 1024:         # v5e / v6e: 128 MiB VMEM
        return 64 * 1024 * 1024, 100 * 1024 * 1024
    return 24 * 1024 * 1024, 48 * 1024 * 1024   # v7x: 64 MiB per TensorCore


def _choose_channel_tile(C, N, in_bytes, out_bytes, tile_budget):
    """Channel tile (multiple of 128) and grid length.

    Accounts for double-buffered in/out DMA tiles, the small (2, tc) vectors
    and the in-kernel f32 row-chunk working set.  Prefers >=2 and even grid
    steps so v7x's two TensorCores get a balanced split.
    """
    rc = min(N, _ROW_CHUNK)
    # per 128-lane column (bytes): 2x-buffered x/out tiles + f32 row chunk
    # (chunk + one temp + output staging) + the six small (1, tc) f32 rows.
    per_col = 2 * N * (in_bytes + out_bytes) + 3 * rc * 4 + 16 * 4
    if per_col * _LANE > tile_budget:
        # TODO(synk): add an N-tiled two-pass fallback (accumulate sum/sumsq
        # over an 'arbitrary' batch grid axis, then a normalize pass) for
        # very large batch sizes instead of erroring out.
        raise ValueError(
            "MetaBatchNorm1d: batch dimension too large for a single "
            "(N, 128) channel tile in VMEM")
    cap_cols = tile_budget // (per_col * _LANE)

    k = pl.cdiv(C, _LANE)                 # channel extent in 128-lane columns
    g = max(1, pl.cdiv(k, cap_cols))      # minimum #grid steps that fits VMEM
    if k >= 2:
        if g == 1:
            g = 2                         # split so both v7x TCs get work
        elif g % 2 == 1:
            g += 1                        # prefer an even split (2:1 -> 2:2)
    g = min(g, k)
    m = pl.cdiv(k, g)                     # 128-lane columns per tile
    tc = m * _LANE
    return tc, pl.cdiv(k, m)


def _bn1d_train_kernel(x_ref, wb_ref, rs_ref, out_ref, nrs_ref, *,
                       eps, eaf, eaf_var, inv_n, row_chunk):
    """One channel tile: streamed batch stats, normalize+affine, stat update."""
    n = x_ref.shape[0]
    tc = x_ref.shape[1]
    n_full = n // row_chunk
    rem = n - n_full * row_chunk
    unroll = n_full <= 8

    def chunk_sums(start, size):
        xc = x_ref[pl.ds(start, size), :].astype(jnp.float32)
        return (jnp.sum(xc, axis=0, keepdims=True),
                jnp.sum(xc * xc, axis=0, keepdims=True))

    # Pass 1: per-lane sum and sum-of-squares, accumulated in f32.
    s = jnp.zeros((1, tc), jnp.float32)
    ss = jnp.zeros((1, tc), jnp.float32)
    if n_full > 0:
        def acc_body(i, carry):
            start = pl.multiple_of(i * row_chunk, row_chunk)
            cs, css = chunk_sums(start, row_chunk)
            return carry[0] + cs, carry[1] + css
        s, ss = lax.fori_loop(0, n_full, acc_body, (s, ss), unroll=unroll)
    if rem > 0:
        cs, css = chunk_sums(n_full * row_chunk, rem)
        s, ss = s + cs, ss + css

    mean = s * inv_n
    var = jnp.maximum(ss * inv_n - mean * mean, 0.0)      # biased variance

    w = wb_ref[0:1, :]
    b = wb_ref[1:2, :]
    scale = lax.rsqrt(var + eps) * w                      # folded affine scale
    shift = b - mean * scale

    # Pass 2: out = x * scale + shift, streamed straight ref -> ref.
    def write_chunk(start, size):
        xc = x_ref[pl.ds(start, size), :].astype(jnp.float32)
        out_ref[pl.ds(start, size), :] = (xc * scale + shift).astype(out_ref.dtype)

    if n_full > 0:
        def out_body(i, carry):
            write_chunk(pl.multiple_of(i * row_chunk, row_chunk), row_chunk)
            return carry
        lax.fori_loop(0, n_full, out_body, 0, unroll=unroll)
    if rem > 0:
        write_chunk(n_full * row_chunk, rem)

    # Running-stat update (unbiased n/(n-1) correction folded into eaf_var).
    nrs_ref[0:1, :] = eaf * mean + (1.0 - eaf) * rs_ref[0:1, :]
    nrs_ref[1:2, :] = eaf_var * var + (1.0 - eaf) * rs_ref[1:2, :]


def _bn1d_eval_kernel(x_ref, ss_ref, out_ref, *, row_chunk):
    """Eval path: pure out = x * scale + shift (scale/shift precomputed)."""
    n = x_ref.shape[0]
    n_full = n // row_chunk
    rem = n - n_full * row_chunk
    unroll = n_full <= 8
    scale = ss_ref[0:1, :]
    shift = ss_ref[1:2, :]

    def write_chunk(start, size):
        xc = x_ref[pl.ds(start, size), :].astype(jnp.float32)
        out_ref[pl.ds(start, size), :] = (xc * scale + shift).astype(out_ref.dtype)

    if n_full > 0:
        def body(i, carry):
            write_chunk(pl.multiple_of(i * row_chunk, row_chunk), row_chunk)
            return carry
        lax.fori_loop(0, n_full, body, 0, unroll=unroll)
    if rem > 0:
        write_chunk(n_full * row_chunk, rem)


def meta_batchnorm1d_forward(x, weight, bias, running_mean, running_var, *,
                             eps=1e-5, momentum=0.1, training=True,
                             donate_running_stats=False):
    """Forward of MetaBatchNorm1d for 2-D (batch, num_features) input.

    Returns (out, new_running_mean, new_running_var).  In training mode the
    running stats are the functionally-updated buffers (PyTorch updates them
    in place; pass donate_running_stats=True to alias them to the outputs).
    In eval mode they are returned unchanged.
    """
    # TODO(synk): (N, C, L) BatchNorm1d inputs (stats over dims (0, 2)),
    # track_running_stats=False and momentum=None (cumulative average /
    # num_batches_tracked) paths are not handled here.
    assert x.ndim == 2, "expected (batch, num_features) input"
    N, C = x.shape
    if training and N <= 1:
        raise ValueError("Expected more than 1 value per channel when training")

    f32 = jnp.float32
    in_dt = x.dtype
    if weight is None:
        weight = jnp.ones((C,), f32)
    if bias is None:
        bias = jnp.zeros((C,), f32)

    wb = jnp.stack([weight.astype(f32), bias.astype(f32)])                 # (2, C)
    rs = jnp.stack([running_mean.astype(f32), running_var.astype(f32)])    # (2, C)

    in_b = jnp.dtype(in_dt).itemsize
    out_b = in_b
    tile_budget, vmem_limit = _vmem_budget()
    tc, n_steps = _choose_channel_tile(C, N, in_b, out_b, tile_budget)
    grid = (n_steps,)

    x_spec = pl.BlockSpec((N, tc), lambda j: (0, j))
    vec2_spec = pl.BlockSpec((2, tc), lambda j: (0, j))
    cparams = pltpu.CompilerParams(
        dimension_semantics=("parallel",),
        vmem_limit_bytes=vmem_limit,
    )

    if training:
        kernel = functools.partial(
            _bn1d_train_kernel,
            eps=float(eps),
            eaf=float(momentum),
            eaf_var=float(momentum) * float(N) / (float(N) - 1.0),
            inv_n=1.0 / float(N),
            row_chunk=_ROW_CHUNK,
        )
        cost = pl.CostEstimate(
            flops=5 * N * C + 10 * C,
            transcendentals=C,
            bytes_accessed=N * C * (in_b + out_b) + 6 * C * 4,
        )
        out, new_rs = pl.pallas_call(
            kernel,
            out_shape=(jax.ShapeDtypeStruct((N, C), in_dt),
                       jax.ShapeDtypeStruct((2, C), f32)),
            grid=grid,
            in_specs=[x_spec, vec2_spec, vec2_spec],
            out_specs=(x_spec, vec2_spec),
            input_output_aliases=({2: 1} if donate_running_stats else {}),
            compiler_params=cparams,
            cost_estimate=cost,
        )(x, wb, rs)
        return out, new_rs[0], new_rs[1]

    # Eval path: fold running stats + affine into a single scale/shift pair
    # once (O(C) wrapper op), kernel is a pure streamed FMA.
    scale = lax.rsqrt(rs[1] + float(eps)) * wb[0]
    shift = wb[1] - rs[0] * scale
    ss = jnp.stack([scale, shift])                                         # (2, C)
    cost = pl.CostEstimate(
        flops=2 * N * C,
        transcendentals=0,
        bytes_accessed=N * C * (in_b + out_b) + 2 * C * 4,
    )
    out = pl.pallas_call(
        functools.partial(_bn1d_eval_kernel, row_chunk=_ROW_CHUNK),
        out_shape=jax.ShapeDtypeStruct((N, C), in_dt),
        grid=grid,
        in_specs=[x_spec, vec2_spec],
        out_specs=x_spec,
        compiler_params=cparams,
        cost_estimate=cost,
    )(x, ss)
    return out, running_mean, running_var


def _reference_train(x, w, b, rm, rv, eps, momentum):
    x32 = x.astype(jnp.float32)
    mean = x32.mean(axis=0)
    var = ((x32 - mean) ** 2).mean(axis=0)
    n = x.shape[0]
    new_rm = momentum * mean + (1.0 - momentum) * rm
    new_rv = momentum * var * n / (n - 1.0) + (1.0 - momentum) * rv
    out = (x32 - mean) / jnp.sqrt(var + eps) * w + b
    return out.astype(x.dtype), new_rm, new_rv


if __name__ == "__main__":
    key = jax.random.PRNGKey(0)
    kx, kw, kb, kx2, kx3 = jax.random.split(key, 5)

    # --- f32: batch=8, num_features=32 (C < 128: single ragged channel tile),
    #     exercising the donated / aliased running-stat path ---
    N, C = 8, 32
    x = jax.random.normal(kx, (N, C), jnp.float32) * 2.0 + 0.5
    weight = 1.0 + 0.1 * jax.random.normal(kw, (C,), jnp.float32)
    bias = 0.1 * jax.random.normal(kb, (C,), jnp.float32)
    rm = jnp.zeros((C,), jnp.float32)
    rv = jnp.ones((C,), jnp.float32)

    out, new_rm, new_rv = meta_batchnorm1d_forward(
        x, weight, bias, rm, rv, donate_running_stats=True)
    jax.block_until_ready((out, new_rm, new_rv))

    r_out, r_rm, r_rv = _reference_train(x, weight, bias, rm, rv, 1e-5, 0.1)
    assert out.shape == (N, C) and out.dtype == x.dtype
    assert jnp.allclose(out, r_out, atol=1e-4, rtol=1e-4)
    assert jnp.allclose(new_rm, r_rm, atol=1e-5, rtol=1e-5)
    assert jnp.allclose(new_rv, r_rv, atol=1e-5, rtol=1e-5)

    # --- bf16, C=160 (ragged last tile, 2 grid steps), native-dtype DMA ---
    N2, C2 = 16, 160
    xb = (jax.random.normal(kx2, (N2, C2), jnp.float32) * 1.5 - 0.3).astype(jnp.bfloat16)
    w2 = jnp.ones((C2,), jnp.float32)
    b2 = jnp.zeros((C2,), jnp.float32)
    rm2 = jnp.zeros((C2,), jnp.float32)
    rv2 = jnp.ones((C2,), jnp.float32)

    outb, nrm2, nrv2 = meta_batchnorm1d_forward(xb, w2, b2, rm2, rv2)
    jax.block_until_ready((outb, nrm2, nrv2))
    assert outb.dtype == jnp.bfloat16 and outb.shape == (N2, C2)
    rb_out, rb_rm, rb_rv = _reference_train(xb, w2, b2, rm2, rv2, 1e-5, 0.1)
    assert jnp.allclose(outb.astype(jnp.float32), rb_out.astype(jnp.float32),
                        atol=5e-2, rtol=5e-2)
    assert jnp.allclose(nrm2, rb_rm, atol=1e-3, rtol=1e-3)
    assert jnp.allclose(nrv2, rb_rv, atol=1e-3, rtol=1e-3)

    # --- f32, batch=520 > row chunk: exercises the streamed fori_loop path ---
    N3, C3 = 520, 64
    x3 = jax.random.normal(kx3, (N3, C3), jnp.float32) * 1.2 + 0.1
    w3 = 1.0 + 0.05 * jnp.arange(C3, dtype=jnp.float32) / C3
    b3 = 0.02 * jnp.arange(C3, dtype=jnp.float32) / C3
    rm3 = jnp.zeros((C3,), jnp.float32)
    rv3 = jnp.ones((C3,), jnp.float32)
    out3, nrm3, nrv3 = meta_batchnorm1d_forward(x3, w3, b3, rm3, rv3)
    jax.block_until_ready((out3, nrm3, nrv3))
    r3_out, r3_rm, r3_rv = _reference_train(x3, w3, b3, rm3, rv3, 1e-5, 0.1)
    assert jnp.allclose(out3, r3_out, atol=1e-4, rtol=1e-4)
    assert jnp.allclose(nrm3, r3_rm, atol=1e-5, rtol=1e-5)
    assert jnp.allclose(nrv3, r3_rv, atol=1e-4, rtol=1e-4)

    # --- eval path: pure scale/shift with the updated running stats ---
    oe, erm, erv = meta_batchnorm1d_forward(x, weight, bias, new_rm, new_rv,
                                            training=False)
    jax.block_until_ready(oe)
    r_oe = (x - new_rm) / jnp.sqrt(new_rv + 1e-5) * weight + bias
    assert jnp.allclose(oe, r_oe, atol=1e-4, rtol=1e-4)
    assert jnp.allclose(erm, new_rm) and jnp.allclose(erv, new_rv)

    print("KERNEL_OK")
</pallas_src>

<mosaic_0001>
module attributes {stable_mosaic.version = 11 : i64} {
  func.func @_bn1d_train_kernel(%arg0: i32, %arg1: memref<8x128xf32, #tpu.memory_space<vmem>>, %arg2: memref<2x128xf32, #tpu.memory_space<vmem>>, %arg3: memref<2x128xf32, #tpu.memory_space<vmem>>, %arg4: memref<8x128xf32, #tpu.memory_space<vmem>>, %arg5: memref<2x128xf32, #tpu.memory_space<vmem>>) attributes {dimension_semantics = [#tpu.dimension_semantics<parallel>], iteration_bounds = array<i64: 1>, scalar_prefetch = 0 : i64, scratch_operands = 0 : i64, tpu.core_type = #tpu.core_type<tc>, window_params = [{transform_indices = @transform_0, window_bounds = array<i64: 8, 128>}, {transform_indices = @transform_1, window_bounds = array<i64: 2, 128>}, {transform_indices = @transform_2, window_bounds = array<i64: 2, 128>}, {transform_indices = @transform_3, window_bounds = array<i64: 8, 128>}, {transform_indices = @transform_4, window_bounds = array<i64: 2, 128>}]} {
    %cst = arith.constant 0.000000e+00 : f32
    %0 = vector.broadcast %cst : f32 to vector<1x128xf32>
    %cst_0 = arith.constant 0.000000e+00 : f32
    %1 = vector.broadcast %cst_0 : f32 to vector<1x128xf32>
    %c0 = arith.constant 0 : index
    %c0_1 = arith.constant 0 : index
    %2 = vector.load %arg1[%c0, %c0_1] : memref<8x128xf32, #tpu.memory_space<vmem>>, vector<8x128xf32>
    %cst_2 = arith.constant dense<0.000000e+00> : vector<128xf32>
    %3 = vector.multi_reduction <add>, %2, %cst_2 [0] : vector<8x128xf32> to vector<128xf32>
    %4 = vector.shape_cast %3 : vector<128xf32> to vector<1x128xf32>
    %5 = arith.mulf %2, %2 : vector<8x128xf32>
    %cst_3 = arith.constant dense<0.000000e+00> : vector<128xf32>
    %6 = vector.multi_reduction <add>, %5, %cst_3 [0] : vector<8x128xf32> to vector<128xf32>
    %7 = vector.shape_cast %6 : vector<128xf32> to vector<1x128xf32>
    %8 = arith.addf %0, %4 : vector<1x128xf32>
    %9 = arith.addf %1, %7 : vector<1x128xf32>
    %cst_4 = arith.constant 1.250000e-01 : f32
    %10 = vector.broadcast %cst_4 : f32 to vector<1x128xf32>
    %11 = arith.mulf %8, %10 : vector<1x128xf32>
    %cst_5 = arith.constant 1.250000e-01 : f32
    %12 = vector.broadcast %cst_5 : f32 to vector<1x128xf32>
    %13 = arith.mulf %9, %12 : vector<1x128xf32>
    %14 = arith.mulf %11, %11 : vector<1x128xf32>
    %15 = arith.subf %13, %14 : vector<1x128xf32>
    %cst_6 = arith.constant 0.000000e+00 : f32
    %16 = vector.broadcast %cst_6 : f32 to vector<1x128xf32>
    %17 = arith.maximumf %15, %16 : vector<1x128xf32>
    %c0_7 = arith.constant 0 : index
    %c0_8 = arith.constant 0 : index
    %18 = vector.load %arg2[%c0_7, %c0_8] : memref<2x128xf32, #tpu.memory_space<vmem>>, vector<1x128xf32>
    %c1 = arith.constant 1 : index
    %c0_9 = arith.constant 0 : index
    %19 = vector.load %arg2[%c1, %c0_9] : memref<2x128xf32, #tpu.memory_space<vmem>>, vector<1x128xf32>
    %cst_10 = arith.constant 9.99999974E-6 : f32
    %20 = vector.broadcast %cst_10 : f32 to vector<1x128xf32>
    %21 = arith.addf %17, %20 : vector<1x128xf32>
    %22 = math.rsqrt %21 : vector<1x128xf32>
    %23 = arith.mulf %22, %18 : vector<1x128xf32>
    %24 = arith.mulf %11, %23 : vector<1x128xf32>
    %25 = arith.subf %19, %24 : vector<1x128xf32>
    %c0_11 = arith.constant 0 : index
    %c0_12 = arith.constant 0 : index
    %26 = vector.load %arg1[%c0_11, %c0_12] : memref<8x128xf32, #tpu.memory_space<vmem>>, vector<8x128xf32>
    %27 = vector.broadcast %23 : vector<1x128xf32> to vector<8x128xf32>
    %28 = arith.mulf %26, %27 : vector<8x128xf32>
    %29 = vector.broadcast %25 : vector<1x128xf32> to vector<8x128xf32>
    %30 = arith.addf %28, %29 : vector<8x128xf32>
    %c0_13 = arith.constant 0 : index
    %c0_14 = arith.constant 0 : index
    %31 = vector.load %arg4[%c0_13, %c0_14] : memref<8x128xf32, #tpu.memory_space<vmem>>, vector<8x128xf32>
    tpu.vector_store %arg4[%c0_13, %c0_14], %30 {strides = array<i32>} : memref<8x128xf32, #tpu.memory_space<vmem>>, vector<8x128xf32>,
    %cst_15 = arith.constant 1.000000e-01 : f32
    %32 = vector.broadcast %cst_15 : f32 to vector<1x128xf32>
    %33 = arith.mulf %32, %11 : vector<1x128xf32>
    %c0_16 = arith.constant 0 : index
    %c0_17 = arith.constant 0 : index
    %34 = vector.load %arg3[%c0_16, %c0_17] : memref<2x128xf32, #tpu.memory_space<vmem>>, vector<1x128xf32>
    %cst_18 = arith.constant 0.899999976 : f32
    %35 = vector.broadcast %cst_18 : f32 to vector<1x128xf32>
    %36 = arith.mulf %35, %34 : vector<1x128xf32>
    %37 = arith.addf %33, %36 : vector<1x128xf32>
    %c0_19 = arith.constant 0 : index
    %c0_20 = arith.constant 0 : index
    %38 = vector.load %arg5[%c0_19, %c0_20] : memref<2x128xf32, #tpu.memory_space<vmem>>, vector<1x128xf32>
    tpu.vector_store %arg5[%c0_19, %c0_20], %37 {strides = array<i32>} : memref<2x128xf32, #tpu.memory_space<vmem>>, vector<1x128xf32>,
    %cst_21 = arith.constant 0.114285715 : f32
    %39 = vector.broadcast %cst_21 : f32 to vector<1x128xf32>
    %40 = arith.mulf %39, %17 : vector<1x128xf32>
    %c1_22 = arith.constant 1 : index
    %c0_23 = arith.constant 0 : index
    %41 = vector.load %arg3[%c1_22, %c0_23] : memref<2x128xf32, #tpu.memory_space<vmem>>, vector<1x128xf32>
    %cst_24 = arith.constant 0.899999976 : f32
    %42 = vector.broadcast %cst_24 : f32 to vector<1x128xf32>
    %43 = arith.mulf %42, %41 : vector<1x128xf32>
    %44 = arith.addf %40, %43 : vector<1x128xf32>
    %c1_25 = arith.constant 1 : index
    %c0_26 = arith.constant 0 : index
    %45 = vector.load %arg5[%c1_25, %c0_26] : memref<2x128xf32, #tpu.memory_space<vmem>>, vector<1x128xf32>
    tpu.vector_store %arg5[%c1_25, %c0_26], %44 {strides = array<i32>} : memref<2x128xf32, #tpu.memory_space<vmem>>, vector<1x128xf32>,
    return
  }
  func.func @transform_0(%arg0: i32) -> (i32, i32) {
    %c0_i32 = arith.constant 0 : i32
    %c0_i32_0 = arith.constant 0 : i32
    return %c0_i32, %arg0 : i32, i32
  }
  func.func @transform_1(%arg0: i32) -> (i32, i32) {
    %c0_i32 = arith.constant 0 : i32
    %c0_i32_0 = arith.constant 0 : i32
    return %c0_i32, %arg0 : i32, i32
  }
  func.func @transform_2(%arg0: i32) -> (i32, i32) {
    %c0_i32 = arith.constant 0 : i32
    %c0_i32_0 = arith.constant 0 : i32
    return %c0_i32, %arg0 : i32, i32
  }
  func.func @transform_3(%arg0: i32) -> (i32, i32) {
    %c0_i32 = arith.constant 0 : i32
    %c0_i32_0 = arith.constant 0 : i32
    return %c0_i32, %arg0 : i32, i32
  }
  func.func @transform_4(%arg0: i32) -> (i32, i32) {
    %c0_i32 = arith.constant 0 : i32
    %c0_i32_0 = arith.constant 0 : i32
    return %c0_i32, %arg0 : i32, i32
  }
}

</mosaic_0001>

<llo_original>
// kernel: tpu_custom_call.1
$region0: #{tpu_custom_call.1}
  #allocation0 [shape = 'u32[]', space=smem, size = 0x4, offset = 0x4, fixed_abs, tag = 'smem constant byte address 0x4 - core index']
  #allocation1 [shape = 'u32[144,128]{1,0:T(1,128)}', space=vmem, size = 0x12000, scoped, tag = 'internal scratch']
  %s0 = inlined_call_operand.vmem [shape: f32[8,32], index: 0, kind: input, shape index: {}]
  %s1 = inlined_call_operand.vmem [shape: f32[2,32], index: 1, kind: input, shape index: {}]
  %s2 = inlined_call_operand.hbm [shape: f32[2,32], index: 2, kind: input, shape index: {}, may-alias: {2,4}]
  %s3 = inlined_call_operand.hbm [shape: f32[8,32], index: 3, kind: output, shape index: {0}]
  %s4 = inlined_call_operand.hbm [shape: f32[2,32], index: 4, kind: output, shape index: {1}, may-alias: {2,4}]
  %5 = xla_tuple %s3, %s4
  %s6 = sld [smem:[#allocation0]]
  $region34: #{tpu_custom_call.1} parent=0
    _
  %s8 = ssub.s32 1, %s6
  %s9 = scalar_select 0, %s8, %s6
  $region1: #{tpu_custom_call.1} parent=0
    #allocation2 [shape = 'u8[1024]{0}', space=vmem, size = 0x400, scoped, tag = 'input window, operand 2, single buffered']
    #allocation3 [shape = 's32[1]{0}', space=sflag, size = 0x4, scoped, tag = 'scoped memory for tpu_custom_call.1']
    #allocation4 [shape = 's32[1]{0}', space=sflag, size = 0x4, scoped, tag = 'scoped memory for tpu_custom_call.1']
    #allocation5 [shape = 'u8[4096]{0}', space=vmem, size = 0x1000, scoped, tag = 'output window, operand 0, single buffered']
    #allocation6 [shape = 'u8[1024]{0}', space=vmem, size = 0x400, scoped, tag = 'output window, operand 1, single buffered']
    #allocation7 [shape = 's32[1]{0}', space=sflag, size = 0x4, scoped, tag = 'scoped memory for tpu_custom_call.1']
    %10 = vsyncpa [#allocation3], 0
    %11 = vsyncpa [#allocation4], 0
    %12 = vsyncpa [#allocation7], 0
    // Predicated region
    $region2: #{tpu_custom_call.1} parent=1 // pred_check
      _
    $region3: #{tpu_custom_call.1} parent=1 // pred_check_branch
      %14 = sbr.rel (0) target = $region5
    $region4: #{tpu_custom_call.1} parent=1 // pred_region
      _
    $region5: #{tpu_custom_call.1} parent=1 // pred_fallthru
      _
    // Predicated region
    $region6: #{tpu_custom_call.1} parent=1 // pred_check
      _
    $region7: #{tpu_custom_call.1} parent=1 // pred_check_branch
      %16 = sbr.rel (0) target = $region9
    $region8: #{tpu_custom_call.1} parent=1 // pred_region
      _
    $region9: #{tpu_custom_call.1} parent=1 // pred_fallthru
      _
    // Predicated region
    $region10: #{tpu_custom_call.1} parent=1 // pred_check
      _
    $region11: #{tpu_custom_call.1} parent=1 // pred_check_branch
      %18 = sbr.rel (0) target = $region13
    $region12: #{tpu_custom_call.1} parent=1 // pred_region
      %s20 = ssub.s32 32, 32
      %21 = vsyncadd [#allocation3], %s20
      %s23 = sshll.u32 [#allocation2], 4
      %s24 = int_to_ptr.vmem [resolvable:$true] %s23
      %26 = dma.hbm_to_vmem [thread:$0]  %s2, 32, %s24, [#allocation3]
    $region13: #{tpu_custom_call.1} parent=1 // pred_fallthru
      _
    // Predicated region
    $region14: #{tpu_custom_call.1} parent=1 // pred_check
      _
    $region15: #{tpu_custom_call.1} parent=1 // pred_check_branch
      %28 = sbr.rel (0) target = $region17
    $region16: #{tpu_custom_call.1} parent=1 // pred_region
      %29 = dma.done [#allocation3], 32
    $region17: #{tpu_custom_call.1} parent=1 // pred_fallthru
      _
    %v30 = vld [vmem:[%s0] sm:$0xff]
    %v31 = vrot.slane %v30, 4
    %v32 = vadd.f32 %v30, %v31
    %v33 = vrot.slane %v32, 2
    %v34 = vadd.f32 %v32, %v33
    %v35 = vrot.slane %v34, 1
    %v36 = vadd.f32 %v34, %v35
    %v37 = vmul.f32 %v30, %v30
    %v38 = vrot.slane %v37, 4
    %v39 = vadd.f32 %v37, %v38
    %v40 = vrot.slane %v39, 2
    %v41 = vadd.f32 %v39, %v40
    %v42 = vrot.slane %v41, 1
    %v43 = vadd.f32 %v41, %v42
    %v44 = vadd.f32 %v36, 0.0
    %v45 = vadd.f32 %v43, 0.0
    %v46 = vmul.f32 %v44, 0.125
    %v47 = vmul.f32 %v45, 0.125
    %v48 = vmul.f32 %v46, %v46
    %v49 = vsub.f32 %v47, %v48
    %v50 = vmax.f32 %v49, 0.0
    %v51 = vld [vmem:[%s1] sm:$0x1]
    %v52 = vld [vmem:[%s1 + $0x1] sm:$0x1]
    %v53 = vadd.f32 %v50, 1e-05
    %v54 = vrsqrt.pop %v53
    %v55 = vmul.f32 %v54, %v51
    %v56 = vmul.f32 %v46, %v55
    %v57 = vsub.f32 %v52, %v56
    %v58 = vlaneseq
    %v59 = vshrl.u32 %v58, 7
    %v60 = vsub.s32 0, %v59
    %v61 = vrot.slane %v55, %v60
    %v62 = vmul.f32 %v30, %v61
    %v63 = vlaneseq
    %v64 = vshrl.u32 %v63, 7
    %v65 = vsub.s32 0, %v64
    %v66 = vrot.slane %v57, %v65
    %v67 = vadd.f32 %v62, %v66
    %68 = vst [vmem:[#allocation5] sm:$0xff] %v67
    %v69 = vmul.f32 %v46, 0.1
    %v70 = vld [vmem:[#allocation2] sm:$0x1]
    %v71 = vmul.f32 %v70, 0.9
    %v72 = vadd.f32 %v69, %v71
    %73 = vst [vmem:[#allocation6] sm:$0x1] %v72
    %v74 = vmul.f32 %v50, 0.114285715
    %v75 = vld [vmem:[#allocation2 + $0x1] sm:$0x1]
    %v76 = vmul.f32 %v75, 0.9
    %v77 = vadd.f32 %v74, %v76
    %78 = vst [vmem:[#allocation6 + $0x1] sm:$0x1] %v77
    // Predicated region
    $region18: #{tpu_custom_call.1} parent=1 // pred_check
      _
    $region19: #{tpu_custom_call.1} parent=1 // pred_check_branch
      %80 = sbr.rel (0) target = $region21
    $region20: #{tpu_custom_call.1} parent=1 // pred_region
      %s82 = ssub.s32 128, 128
      %83 = vsyncadd [#allocation4], %s82
      %s85 = sshll.u32 [#allocation5], 4
      %s86 = int_to_ptr.vmem [resolvable:$true] %s85
      %88 = dma.vmem_to_hbm [thread:$0]  %s86, 128, %s3, [#allocation4]
    $region21: #{tpu_custom_call.1} parent=1 // pred_fallthru
      _
    // Predicated region
    $region22: #{tpu_custom_call.1} parent=1 // pred_check
      _
    $region23: #{tpu_custom_call.1} parent=1 // pred_check_branch
      %90 = sbr.rel (0) target = $region25
    $region24: #{tpu_custom_call.1} parent=1 // pred_region
      %s92 = ssub.s32 32, 32
      %93 = vsyncadd [#allocation7], %s92
      %s95 = sshll.u32 [#allocation6], 4
      %s96 = int_to_ptr.vmem [resolvable:$true] %s95
      %98 = dma.vmem_to_hbm [thread:$0]  %s96, 32, %s4, [#allocation7]
    $region25: #{tpu_custom_call.1} parent=1 // pred_fallthru
      _
    // Predicated region
    $region26: #{tpu_custom_call.1} parent=1 // pred_check
      _
    $region27: #{tpu_custom_call.1} parent=1 // pred_check_branch
      %100 = sbr.rel (0) target = $region29
    $region28: #{tpu_custom_call.1} parent=1 // pred_region
      %101 = dma.done [#allocation4], 128
    $region29: #{tpu_custom_call.1} parent=1 // pred_fallthru
      _
    // Predicated region
    $region30: #{tpu_custom_call.1} parent=1 // pred_check
      _
    $region31: #{tpu_custom_call.1} parent=1 // pred_check_branch
      %103 = sbr.rel (0) target = $region33
    $region32: #{tpu_custom_call.1} parent=1 // pred_region
      %104 = dma.done [#allocation7], 32
    $region33: #{tpu_custom_call.1} parent=1 // pred_fallthru
      _
    %105 = vsyncpa [#allocation3], 1
    %106 = vsyncpa [#allocation4], 1
    %107 = vsyncpa [#allocation7], 1

</llo_original>
